<compile_context>
chip_gen: v7x
topology: tpu7x:2x2x1
jax: 0.10.0
libtpu: 0.0.40
codegen_flags: <defaults>
</compile_context>

<pallas_src>
import functools

import jax
import jax.numpy as jnp
from jax.experimental import pallas as pl
from jax.experimental.pallas import tpu as pltpu


def _round_up(x, m):
    return (x + m - 1) // m * m


def _pick_row_tile(n, target=256):
    """Largest row tile that divides n, is a multiple of 8, and is <= target."""
    if n <= target:
        return n
    best = None
    for tm in range(8, target + 1, 8):
        if n % tm == 0:
            best = tm
    return best if best is not None else n


# ---------------------------------------------------------------------------
# Stage 1: per-metapath feature transform  HW_p = (H @ W_p) * (1/P)   -> bf16
# ---------------------------------------------------------------------------
def _hw_kernel(h_ref, w_ref, hw_ref, *, inv_p):
    """h_ref: [N, F_in] f32, w_ref: [F_in, F_pad] f32, hw_ref: [N, F_pad] bf16."""
    hw = jnp.dot(h_ref[...], w_ref[...], preferred_element_type=jnp.float32)
    hw_ref[...] = (hw * inv_p).astype(hw_ref.dtype)


# ---------------------------------------------------------------------------
# Stage 2: adjacency streaming + semantic fusion (mean folded into HW)
# ---------------------------------------------------------------------------
def _metapath_fuse_kernel(a_ref, hw_ref, o_ref):
    """One grid step = one (row tile, metapath) pair.

    a_ref  : [TM, N]      bf16 adjacency row tile of metapath p
    hw_ref : [N, F_pad]   bf16 pre-transformed features of metapath p
    o_ref  : [TM, F_pad]  f32 fused output tile (same block for every p ->
                          resident accumulator; no extra VMEM scratch needed)
    """
    p = pl.program_id(1)
    z = jnp.dot(a_ref[...], hw_ref[...], preferred_element_type=jnp.float32)

    @pl.when(p == 0)
    def _():
        o_ref[...] = z

    @pl.when(p > 0)
    def _():
        o_ref[...] += z


def metapath_conv(adjs, h, weights, *, row_tile=None):
    """adjs: [P, N, N], h: [N, F_in], weights: [P, F_in, F_out] -> [N, F_out]."""
    P, N, _ = adjs.shape
    F_in = h.shape[1]
    F_out = weights.shape[2]
    F_pad = _round_up(F_out, 128)

    # Lane-pad the output feature dim so MXU result columns / stores are dense.
    if F_pad != F_out:
        weights = jnp.pad(weights, ((0, 0), (0, 0), (0, F_pad - F_out)))

    # ---------------- Stage 1: HW_p = (H @ W_p) / P, once per metapath ------
    hw = pl.pallas_call(
        functools.partial(_hw_kernel, inv_p=float(1.0 / P)),
        out_shape=jax.ShapeDtypeStruct((P, N, F_pad), jnp.bfloat16),
        grid_spec=pltpu.PrefetchScalarGridSpec(
            num_scalar_prefetch=0,
            grid=(P,),
            in_specs=[
                pl.BlockSpec((N, F_in), lambda p: (0, 0)),
                pl.BlockSpec((pl.Squeezed(), F_in, F_pad), lambda p: (p, 0, 0)),
            ],
            out_specs=pl.BlockSpec((pl.Squeezed(), N, F_pad), lambda p: (p, 0, 0)),
        ),
        compiler_params=pltpu.CompilerParams(
            dimension_semantics=("parallel",),  # metapaths independent here
        ),
    )(h, weights)

    # ---------------- Stage 2: stream bf16 adjacency row tiles --------------
    adjs_bf16 = adjs.astype(jnp.bfloat16)  # halves HBM bytes on the dominant stream

    tm = row_tile if row_tile is not None else _pick_row_tile(N)
    assert N % tm == 0, f"row tile {tm} must divide N={N}"
    assert tm == N or tm % 8 == 0, "row tile must be a multiple of 8 (sublane)"

    out_padded = pl.pallas_call(
        _metapath_fuse_kernel,
        out_shape=jax.ShapeDtypeStruct((N, F_pad), jnp.float32),
        grid_spec=pltpu.PrefetchScalarGridSpec(
            num_scalar_prefetch=0,
            grid=(N // tm, P),  # metapath (reduction) axis innermost
            in_specs=[
                pl.BlockSpec((pl.Squeezed(), tm, N), lambda i, p: (p, i, 0)),
                pl.BlockSpec((pl.Squeezed(), N, F_pad), lambda i, p: (p, 0, 0)),
            ],
            out_specs=pl.BlockSpec((tm, F_pad), lambda i, p: (i, 0)),
        ),
        compiler_params=pltpu.CompilerParams(
            # Row tiles split across TensorCores (v7x megacore); metapath axis is
            # a reduction into the resident output block.
            dimension_semantics=("parallel", "arbitrary"),
        ),
    )(adjs_bf16, hw)

    # Drop lane padding; keep caller dtype.
    return out_padded[:, :F_out].astype(h.dtype)


def metapath_conv_forward(g_adjs_dict, h_dict, weights_dict, src_type, dst_type,
                          *, row_tile=None):
    """Mirrors MetapathConv.forward for a single (src, dst) node type.

    g_adjs_dict  : dict[str, [N, N]]        dense normalized metapath adjacencies
    h_dict       : dict[str, [N, F_in]]     input node features
    weights_dict : dict[str, [F_in, F_out]] per-metapath GraphConv weights
    Returns dict[str, [N, F_out]].
    """
    mp_names = list(g_adjs_dict.keys())
    adjs = jnp.stack([g_adjs_dict[mp] for mp in mp_names], axis=0)
    weights = jnp.stack([weights_dict[mp] for mp in mp_names], axis=0)
    h = h_dict[src_type]
    fused = metapath_conv(adjs, h, weights, row_tile=row_tile)
    # TODO(synk): only 'mean' semantic fusion is implemented; 'attention'
    # macro_func would need an extra per-metapath score pass.
    return {dst_type: fused}


def _make_normalized_adj(key, n):
    """Deterministic random adjacency with self loops, row-normalized."""
    dense = (jax.random.uniform(key, (n, n)) < 0.2).astype(jnp.float32)
    dense = dense + jnp.eye(n, dtype=jnp.float32)
    deg = jnp.sum(dense, axis=1, keepdims=True)
    return dense / deg


if __name__ == "__main__":
    # Small synthetic setup: 1 node type ("paper"), 3 meta-paths,
    # N=256 nodes, F_in=32, F_out=32; row tile 64 exercises the tiled path.
    N, F_IN, F_OUT, P = 256, 32, 32, 3
    mp_names = ["PAP", "PSP", "PTP"]

    key = jax.random.PRNGKey(0)
    k_h, *k_rest = jax.random.split(key, 1 + 2 * P)

    h_dict = {"paper": jax.random.normal(k_h, (N, F_IN), dtype=jnp.float32)}

    g_adjs_dict = {}
    weights_dict = {}
    for i, mp in enumerate(mp_names):
        g_adjs_dict[mp] = _make_normalized_adj(k_rest[2 * i], N)
        weights_dict[mp] = jax.random.normal(
            k_rest[2 * i + 1], (F_IN, F_OUT), dtype=jnp.float32
        ) * (2.0 / (F_IN + F_OUT)) ** 0.5

    out = metapath_conv_forward(
        g_adjs_dict, h_dict, weights_dict, "paper", "paper", row_tile=64
    )
    result = jax.block_until_ready(out["paper"])

    # Pure-JAX f32 reference: mean_p( A_p @ (H @ W_p) ).  The kernel streams the
    # adjacency / transformed features in bf16, so compare with bf16 tolerance.
    ref = jnp.mean(
        jnp.stack(
            [g_adjs_dict[mp] @ (h_dict["paper"] @ weights_dict[mp]) for mp in mp_names],
            axis=0,
        ),
        axis=0,
    )
    assert result.shape == (N, F_OUT)
    assert jnp.allclose(result, ref, atol=2e-2, rtol=2e-2), "mismatch vs reference"

    print("KERNEL_OK")
</pallas_src>

<mosaic_0001>
module attributes {stable_mosaic.version = 11 : i64} {
  func.func @_hw_kernel(%arg0: i32, %arg1: memref<256x32xf32, #tpu.memory_space<vmem>>, %arg2: memref<1x32x128xf32, #tpu.memory_space<vmem>>, %arg3: memref<1x256x128xbf16, #tpu.memory_space<vmem>>) attributes {dimension_semantics = [#tpu.dimension_semantics<parallel>], iteration_bounds = array<i64: 3>, scalar_prefetch = 0 : i64, scratch_operands = 0 : i64, tpu.core_type = #tpu.core_type<tc>, window_params = [{pipeline_mode = #tpu.pipeline_mode<synchronous>, transform_indices = @transform_0, window_bounds = array<i64: 256, 32>}, {transform_indices = @transform_1, window_bounds = array<i64: 1, 32, 128>}, {transform_indices = @transform_2, window_bounds = array<i64: 1, 256, 128>}]} {
    %c0 = arith.constant 0 : index
    %c0_0 = arith.constant 0 : index
    %0 = vector.load %arg1[%c0, %c0_0] : memref<256x32xf32, #tpu.memory_space<vmem>>, vector<256x32xf32>
    %c0_1 = arith.constant 0 : index
    %c0_2 = arith.constant 0 : index
    %c0_3 = arith.constant 0 : index
    %1 = vector.load %arg2[%c0_1, %c0_2, %c0_3] : memref<1x32x128xf32, #tpu.memory_space<vmem>>, vector<1x32x128xf32>
    %2 = vector.shape_cast %1 : vector<1x32x128xf32> to vector<32x128xf32>
    %cst = arith.constant dense<0.000000e+00> : vector<256x128xf32>
    %3 = tpu.matmul %0, %2, %cst {dimension_numbers = #tpu.dot_dimension_numbers<[1], [0], [0], [1], [0, 0, 1, 1], [], []>} : vector<256x32xf32>, vector<32x128xf32>, vector<256x128xf32> -> vector<256x128xf32>
    %cst_4 = arith.constant 0.333333343 : f32
    %4 = vector.broadcast %cst_4 : f32 to vector<256x128xf32>
    %5 = arith.mulf %3, %4 : vector<256x128xf32>
    %6 = arith.truncf %5 : vector<256x128xf32> to vector<256x128xbf16>
    %c0_5 = arith.constant 0 : index
    %c0_6 = arith.constant 0 : index
    %c0_7 = arith.constant 0 : index
    %7 = vector.load %arg3[%c0_5, %c0_6, %c0_7] : memref<1x256x128xbf16, #tpu.memory_space<vmem>>, vector<1x256x128xbf16>
    %8 = vector.shape_cast %7 : vector<1x256x128xbf16> to vector<256x128xbf16>
    %9 = vector.shape_cast %6 : vector<256x128xbf16> to vector<1x256x128xbf16>
    tpu.vector_store %arg3[%c0_5, %c0_6, %c0_7], %9 {strides = array<i32>} : memref<1x256x128xbf16, #tpu.memory_space<vmem>>, vector<1x256x128xbf16>,
    return
  }
  func.func @transform_0(%arg0: i32) -> (i32, i32) {
    %c0_i32 = arith.constant 0 : i32
    %c0_i32_0 = arith.constant 0 : i32
    %c0_i32_1 = arith.constant 0 : i32
    return %c0_i32, %c0_i32_0 : i32, i32
  }
  func.func @transform_1(%arg0: i32) -> (i32, i32, i32) {
    %c0_i32 = arith.constant 0 : i32
    %c0_i32_0 = arith.constant 0 : i32
    %c0_i32_1 = arith.constant 0 : i32
    return %arg0, %c0_i32, %c0_i32_0 : i32, i32, i32
  }
  func.func @transform_2(%arg0: i32) -> (i32, i32, i32) {
    %c0_i32 = arith.constant 0 : i32
    %c0_i32_0 = arith.constant 0 : i32
    %c0_i32_1 = arith.constant 0 : i32
    return %arg0, %c0_i32, %c0_i32_0 : i32, i32, i32
  }
}

</mosaic_0001>

<llo_original>
// kernel: tpu_custom_call.1
$region0: #{tpu_custom_call.1}
  #allocation0 [shape = 'u32[]', space=smem, size = 0x4, offset = 0x4, fixed_abs, tag = 'smem constant byte address 0x4 - core index']
  #allocation1 [shape = 'u32[144,128]{1,0:T(1,128)}', space=vmem, size = 0x12000, scoped, tag = 'internal scratch']
  %s0 = inlined_call_operand.vmem [shape: f32[256,32], index: 0, kind: input, shape index: {}]
  %s1 = inlined_call_operand.vmem [shape: f32[3,32,128], index: 1, kind: input, shape index: {}]
  %s2 = inlined_call_operand.hbm [shape: bf16[3,256,128], index: 2, kind: output, shape index: {}]
  %s3 = sld [smem:[#allocation0]]
  $region41: #{tpu_custom_call.1} parent=0
    _
  %s5 = ssub.s32 1, %s3
  %s6 = scalar_select 0, %s5, %s3
  $region1: #{tpu_custom_call.1} parent=0
    #allocation2 [shape = 'u8[131072]{0}', space=vmem, size = 0x20000, scoped, tag = 'output window, operand 0']
    #allocation3 [shape = 's32[2]{0}', space=sflag, size = 0x8, scoped, tag = 'scoped memory for tpu_custom_call.1']
    %7 = vsyncpa [#allocation3], 0
    %s8 = scalar_lea.sflag [#allocation3], 1
    %9 = vsyncpa %s8, 0
    loop: start=0, step=1, limit=5
    $region2: #{tpu_custom_call.1} parent=1 // loop_pre_header
      _
    $region3: #{tpu_custom_call.1} parent=1 // loop_header
      %s11 = sphi 0, %s15
      %p12 = scmp.ge.s32.totalorder %s11, 5
      %s19 = sphi 0, %s19
      %s21 = sphi 0, %s19
      %s22 = sphi 0, %s21
      %s36 = sphi 0, %s22
      %s42 = sphi 0, %s44
      %s45 = sphi 0, %s42
      %s46 = sphi 0, %s45
      %s62 = sphi 0, %s46
      %s68 = sphi 0, %s70
      %s71 = sphi 0, %s68
      %s72 = sphi 0, %s71
      %s88 = sphi 0, %s72
    $region4: #{tpu_custom_call.1} parent=1 // loop_header_branch
      %14 = sbr.rel (%p12) target = $region8
    $region5: #{tpu_custom_call.1} parent=1 // loop_body
      %s16 = ssub.s32 %s11, 1
      %s17 = ssub.s32 %s11, 2
      %s18 = sadd.s32 %s11, 1
      %s20 = sadd.s32 %s19, 1
      %p23 = scmp.eq.s32.totalorder %s11, 2
      %p24 = scmp.ne.s32.totalorder %s19, %s21
      %p25 = scmp.eq.s32.totalorder %s11, 0
      %p26 = por %p24, %p25
      %p27 = scmp.ne.s32.totalorder %s19, %s21
      %p28 = scmp.eq.s32.totalorder %s16, 2
      %p29 = por %p27, %p28
      %p30 = scmp.ne.s32.totalorder %s21, %s22
      %p31 = scmp.eq.s32.totalorder %s16, 0
      %p32 = por %p30, %p31
      %p33 = scmp.ne.s32.totalorder %s21, %s22
      %p34 = scmp.eq.s32.totalorder %s17, 2
      %p35 = por %p33, %p34
      %p37 = scmp.ne.s32.totalorder %s22, %s36
      %p38 = scmp.eq.s32.totalorder %s17, 0
      %p39 = por %p37, %p38
      %s40 = ssub.s32 %s11, %s18
      %p41 = scmp.eq.s32.totalorder %s40, 0
      %s43 = sadd.s32 %s42, 1
      %s44 = scalar_select %p41, %s42, %s43
      %p47 = pneg %p41
      %p48 = scmp.eq.s32.totalorder %s11, 2
      %p49 = por %p47, %p48
      %p50 = scmp.ne.s32.totalorder %s42, %s45
      %p51 = scmp.eq.s32.totalorder %s11, 0
      %p52 = por %p50, %p51
      %p53 = scmp.ne.s32.totalorder %s42, %s45
      %p54 = scmp.eq.s32.totalorder %s16, 2
      %p55 = por %p53, %p54
      %p56 = scmp.ne.s32.totalorder %s45, %s46
      %p57 = scmp.eq.s32.totalorder %s16, 0
      %p58 = por %p56, %p57
      %p59 = scmp.ne.s32.totalorder %s45, %s46
      %p60 = scmp.eq.s32.totalorder %s17, 2
      %p61 = por %p59, %p60
      %p63 = scmp.ne.s32.totalorder %s46, %s62
      %p64 = scmp.eq.s32.totalorder %s17, 0
      %p65 = por %p63, %p64
      %s66 = ssub.s32 %s11, %s18
      %p67 = scmp.eq.s32.totalorder %s66, 0
      %s69 = sadd.s32 %s68, 1
      %s70 = scalar_select %p67, %s68, %s69
      %p73 = pneg %p67
      %p74 = scmp.eq.s32.totalorder %s11, 2
      %p75 = por %p73, %p74
      %p76 = scmp.ne.s32.totalorder %s68, %s71
      %p77 = scmp.eq.s32.totalorder %s11, 0
      %p78 = por %p76, %p77
      %p79 = scmp.ne.s32.totalorder %s68, %s71
      %p80 = scmp.eq.s32.totalorder %s16, 2
      %p81 = por %p79, %p80
      %p82 = scmp.ne.s32.totalorder %s71, %s72
      %p83 = scmp.eq.s32.totalorder %s16, 0
      %p84 = por %p82, %p83
      %p85 = scmp.ne.s32.totalorder %s71, %s72
      %p86 = scmp.eq.s32.totalorder %s17, 2
      %p87 = por %p85, %p86
      %p89 = scmp.ne.s32.totalorder %s72, %s88
      %p90 = scmp.eq.s32.totalorder %s17, 0
      %p91 = por %p89, %p90
      %p92 = scmp.le.s32.totalorder 1, %s11
      %p93 = scmp.lt.s32.totalorder %s11, 4
      %p94 = pnand %p92, %p93
      %p95 = pneg %p94
      // Predicated region
      $region9: #{tpu_custom_call.1} parent=5 // pred_check
        _
      $region10: #{tpu_custom_call.1} parent=5 // pred_check_branch
        %97 = sbr.rel (%p94) target = $region12
      $region11: #{tpu_custom_call.1} parent=5 // pred_region
        %s98 = ssub.s32 %s11, 1
        // Predicated region
        $region13: #{tpu_custom_call.1} parent=11 // pred_check
          %p99 = pneg %p32
        $region14: #{tpu_custom_call.1} parent=11 // pred_check_branch
          %101 = sbr.rel (%p99) target = $region16
        $region15: #{tpu_custom_call.1} parent=11 // pred_region
          _
        $region16: #{tpu_custom_call.1} parent=11 // pred_fallthru
          _
      $region12: #{tpu_custom_call.1} parent=5 // pred_fallthru
        _
      %p102 = scmp.lt.s32.totalorder %s11, 3
      // Predicated region
      $region17: #{tpu_custom_call.1} parent=5 // pred_check
        %p103 = pneg %p102
      $region18: #{tpu_custom_call.1} parent=5 // pred_check_branch
        %105 = sbr.rel (%p103) target = $region20
      $region19: #{tpu_custom_call.1} parent=5 // pred_region
        // Predicated region
        $region21: #{tpu_custom_call.1} parent=19 // pred_check
          %p106 = pneg %p52
        $region22: #{tpu_custom_call.1} parent=19 // pred_check_branch
          %108 = sbr.rel (%p106) target = $region24
        $region23: #{tpu_custom_call.1} parent=19 // pred_region
          %p109 = scmp.lt.s32.totalorder %s11, 2
          %s110 = scalar_select %p109, %s11, 2
          %s111 = smul.addr %s110, 4
          %s112 = smul.addr %s111, 8
          %s113 = scalar_lea.vmem %s1, %s112
        $region24: #{tpu_custom_call.1} parent=19 // pred_fallthru
          _
      $region20: #{tpu_custom_call.1} parent=5 // pred_fallthru
        _
      %p114 = scmp.le.s32.totalorder 1, %s11
      %p115 = scmp.lt.s32.totalorder %s11, 4
      %p116 = pnand %p114, %p115
      %p117 = pneg %p116
      // Predicated region
      $region25: #{tpu_custom_call.1} parent=5 // pred_check
        _
      $region26: #{tpu_custom_call.1} parent=5 // pred_check_branch
        %119 = sbr.rel (%p116) target = $region28
      $region27: #{tpu_custom_call.1} parent=5 // pred_region
        %s120 = ssub.s32 %s11, 1
        %p121 = pneg %p32
        %p122 = pneg %p29
        %p123 = scmp.lt.s32.totalorder %s16, 2
        %s124 = scalar_select %p123, %s16, 2
        %s125 = smul.addr %s124, 4
        %s126 = smul.addr %s125, 8
        %s127 = scalar_lea.vmem %s1, %s126
        %p128 = pneg %p58
        %p129 = pneg %p55
        %p130 = pneg %p84
        %p131 = pneg %p81
        %s132 = sand.u32 %s71, 1
        %s133 = scalar_lea.sflag [#allocation3], %s132
        %s134 = sand.u32 %s71, 1
        %s135 = smul.addr %s134, 128
        %s136 = scalar_lea.vmem [#allocation2], %s135
        %p137 = scmp.lt.s32.totalorder %s16, 2
        %s138 = scalar_select %p137, %s16, 2
        %s139 = smul.addr %s138, 4
        %s140 = smul.addr %s139, 8
        %s141 = scalar_lea.vmem %s1, %s140
        %v142 = vld [vmem:[%s0] sm:$0xff]
        %v143 = vld [vmem:[%s0 + $0x8] sm:$0xff]
        %v144 = vld [vmem:[%s0 + $0x10] sm:$0xff]
        %v145 = vld [vmem:[%s0 + $0x18] sm:$0xff]
        %v146 = vld [vmem:[%s0 + $0x20] sm:$0xff]
        %v147 = vld [vmem:[%s0 + $0x28] sm:$0xff]
        %v148 = vld [vmem:[%s0 + $0x30] sm:$0xff]
        %v149 = vld [vmem:[%s0 + $0x38] sm:$0xff]
        %v150 = vld [vmem:[%s0 + $0x40] sm:$0xff]
        %v151 = vld [vmem:[%s0 + $0x48] sm:$0xff]
        %v152 = vld [vmem:[%s0 + $0x50] sm:$0xff]
        %v153 = vld [vmem:[%s0 + $0x58] sm:$0xff]
        %v154 = vld [vmem:[%s0 + $0x60] sm:$0xff]
        %v155 = vld [vmem:[%s0 + $0x68] sm:$0xff]
        %v156 = vld [vmem:[%s0 + $0x70] sm:$0xff]
        %v157 = vld [vmem:[%s0 + $0x78] sm:$0xff]
        %v158 = vld [vmem:[%s0 + $0x80] sm:$0xff]
        %v159 = vld [vmem:[%s0 + $0x88] sm:$0xff]
        %v160 = vld [vmem:[%s0 + $0x90] sm:$0xff]
        %v161 = vld [vmem:[%s0 + $0x98] sm:$0xff]
        %v162 = vld [vmem:[%s0 + $0xa0] sm:$0xff]
        %v163 = vld [vmem:[%s0 + $0xa8] sm:$0xff]
        %v164 = vld [vmem:[%s0 + $0xb0] sm:$0xff]
        %v165 = vld [vmem:[%s0 + $0xb8] sm:$0xff]
        %v166 = vld [vmem:[%s0 + $0xc0] sm:$0xff]
        %v167 = vld [vmem:[%s0 + $0xc8] sm:$0xff]
        %v168 = vld [vmem:[%s0 + $0xd0] sm:$0xff]
        %v169 = vld [vmem:[%s0 + $0xd8] sm:$0xff]
        %v170 = vld [vmem:[%s0 + $0xe0] sm:$0xff]
        %v171 = vld [vmem:[%s0 + $0xe8] sm:$0xff]
        %v172 = vld [vmem:[%s0 + $0xf0] sm:$0xff]
        %v173 = vld [vmem:[%s0 + $0xf8] sm:$0xff]
        %v174 = vld [vmem:[%s141] sm:$0xff]
        %v175 = vld [vmem:[%s141 + $0x8] sm:$0xff]
        %v176 = vld [vmem:[%s141 + $0x10] sm:$0xff]
        %v177 = vld [vmem:[%s141 + $0x18] sm:$0xff]
        %vm178 = vcmask 261120
        %v180 = vsel %vm178, %v142, 0
        %v183 = vsel %vm178, %v143, 0
        %v186 = vsel %vm178, %v144, 0
        %v189 = vsel %vm178, %v145, 0
        %v192 = vsel %vm178, %v146, 0
        %v195 = vsel %vm178, %v147, 0
        %v198 = vsel %vm178, %v148, 0
        %v201 = vsel %vm178, %v149, 0
        %v204 = vsel %vm178, %v150, 0
        %v207 = vsel %vm178, %v151, 0
        %v210 = vsel %vm178, %v152, 0
        %v213 = vsel %vm178, %v153, 0
        %v216 = vsel %vm178, %v154, 0
        %v219 = vsel %vm178, %v155, 0
        %v222 = vsel %vm178, %v156, 0
        %v225 = vsel %vm178, %v157, 0
        %v228 = vsel %vm178, %v158, 0
        %v231 = vsel %vm178, %v159, 0
        %v234 = vsel %vm178, %v160, 0
        %v237 = vsel %vm178, %v161, 0
        %v240 = vsel %vm178, %v162, 0
        %v243 = vsel %vm178, %v163, 0
        %v246 = vsel %vm178, %v164, 0
        %v249 = vsel %vm178, %v165, 0
        %v252 = vsel %vm178, %v166, 0
        %v255 = vsel %vm178, %v167, 0
        %v258 = vsel %vm178, %v168, 0
        %v261 = vsel %vm178, %v169, 0
        %v264 = vsel %vm178, %v170, 0
        %v267 = vsel %vm178, %v171, 0
        %v270 = vsel %vm178, %v172, 0
        %v273 = vsel %vm178, %v173, 0
        %275 = vmatprep.subr.mxu0 0.0
        %276 = vmatpush1.msra.mxu0 %v174
        %277 = vmatprep.subr.mxu0 0.0
        %278 = vmatpush1.msra.mxu0 %v175
        %279 = vmatprep.subr.mxu0 0.0
        %280 = vmatpush1.msra.mxu0 %v176
        %281 = vmatprep.subr.mxu0 0.0
        %282 = vmatpush1.msra.mxu0 %v177
        %283 = vmatprep.subr.mxu0 0.0
        %284 = vmatpush1.msra.mxu0 0.0
        %285 = vmatprep.subr.mxu0 0.0
        %286 = vmatpush1.msra.mxu0 0.0
        %287 = vmatprep.subr.mxu0 0.0
        %288 = vmatpush1.msra.mxu0 0.0
        %289 = vmatprep.subr.mxu0 0.0
        %290 = vmatpush1.msra.mxu0 0.0
        %291 = vmatprep.subr.mxu0 0.0
        %292 = vmatpush1.msra.mxu0 0.0
        %293 = vmatprep.subr.mxu0 0.0
        %294 = vmatpush1.msra.mxu0 0.0
        %295 = vmatprep.subr.mxu0 0.0
        %296 = vmatpush1.msra.mxu0 0.0
        %297 = vmatprep.subr.mxu0 0.0
        %298 = vmatpush1.msra.mxu0 0.0
        %299 = vmatprep.subr.mxu0 0.0
        %300 = vmatpush1.msra.mxu0 0.0
        %301 = vmatprep.subr.mxu0 0.0
        %302 = vmatpush1.msra.mxu0 0.0
        %303 = vmatprep.subr.mxu0 0.0
        %304 = vmatpush1.msra.mxu0 0.0
        %305 = vmatprep.subr.mxu0 0.0
        %306 = vmatpush1.msra.mxu0 0.0
        %307 = vmatprep.subr.mxu0 0.0
        %308 = vmatpush1.msra.mxu0 0.0
        %309 = vmatprep.subr.mxu0 0.0
        %310 = vmatpush1.msra.mxu0 0.0
        %311 = vmatprep.subr.mxu0 0.0
        %312 = vmatpush1.msra.mxu0 0.0
        %313 = vmatprep.subr.mxu0 0.0
        %314 = vmatpush1.msra.mxu0 0.0
        %315 = vmatprep.subr.mxu0 0.0
        %316 = vmatpush1.msra.mxu0 0.0
        %317 = vmatprep.subr.mxu0 0.0
        %318 = vmatpush1.msra.mxu0 0.0
        %319 = vmatprep.subr.mxu0 0.0
        %320 = vmatpush1.msra.mxu0 0.0
        %321 = vmatprep.subr.mxu0 0.0
        %322 = vmatpush1.msra.mxu0 0.0
        %323 = vmatprep.subr.mxu0 0.0
        %324 = vmatpush1.msra.mxu0 0.0
        %325 = vmatprep.subr.mxu0 0.0
        %326 = vmatpush1.msra.mxu0 0.0
        %327 = vmatprep.subr.mxu0 0.0
        %328 = vmatpush1.msra.mxu0 0.0
        %329 = vmatprep.subr.mxu0 0.0
        %330 = vmatpush1.msra.mxu0 0.0
        %331 = vmatprep.subr.mxu0 0.0
        %332 = vmatpush1.msra.mxu0 0.0
        %333 = vmatprep.subr.mxu0 0.0
        %334 = vmatpush1.msra.mxu0 0.0
        %335 = vmatprep.subr.mxu0 0.0
        %336 = vmatpush1.msra.mxu0 0.0
        %337 = vmatprep.subr.mxu0 0.0
        %338 = vmatpush1.msra.mxu0 0.0
        %339 = vmatprep.mubr.f32.mxu0 0.0
        %340 = vmatmul.mubr.f32.gmra.mrb[0].mxu0 %v180
        %v341 = vpop.f32.mrb[0].mxu0
        %v342 = vadd.f32 0.0, %v341
        %v343 = vpop.f32.mrb[0].mxu0
        %344 = vmatprep.mubr.f32.mxu0 0.0
        %345 = vmatmul.mubr.f32.gmra.mrb[0].mxu0 %v183
        %v346 = vpop.f32.mrb[0].mxu0
        %v347 = vadd.f32 0.0, %v346
        %v348 = vpop.f32.mrb[0].mxu0
        %349 = vmatprep.mubr.f32.mxu0 0.0
        %350 = vmatmul.mubr.f32.gmra.mrb[0].mxu0 %v186
        %v351 = vpop.f32.mrb[0].mxu0
        %v352 = vadd.f32 0.0, %v351
        %v353 = vpop.f32.mrb[0].mxu0
        %354 = vmatprep.mubr.f32.mxu0 0.0
        %355 = vmatmul.mubr.f32.gmra.mrb[0].mxu0 %v189
        %v356 = vpop.f32.mrb[0].mxu0
        %v357 = vadd.f32 0.0, %v356
        %v358 = vpop.f32.mrb[0].mxu0
        %359 = vmatprep.mubr.f32.mxu0 0.0
        %360 = vmatmul.mubr.f32.gmra.mrb[0].mxu0 %v192
        %v361 = vpop.f32.mrb[0].mxu0
        %v362 = vadd.f32 0.0, %v361
        %v363 = vpop.f32.mrb[0].mxu0
        %364 = vmatprep.mubr.f32.mxu0 0.0
        %365 = vmatmul.mubr.f32.gmra.mrb[0].mxu0 %v195
        %v366 = vpop.f32.mrb[0].mxu0
        %v367 = vadd.f32 0.0, %v366
        %v368 = vpop.f32.mrb[0].mxu0
        %369 = vmatprep.mubr.f32.mxu0 0.0
        %370 = vmatmul.mubr.f32.gmra.mrb[0].mxu0 %v198
        %v371 = vpop.f32.mrb[0].mxu0
        %v372 = vadd.f32 0.0, %v371
        %v373 = vpop.f32.mrb[0].mxu0
        %374 = vmatprep.mubr.f32.mxu0 0.0
        %375 = vmatmul.mubr.f32.gmra.mrb[0].mxu0 %v201
        %v376 = vpop.f32.mrb[0].mxu0
        %v377 = vadd.f32 0.0, %v376
        %v378 = vpop.f32.mrb[0].mxu0
        %379 = vmatprep.mubr.f32.mxu0 0.0
        %380 = vmatmul.mubr.f32.gmra.mrb[0].mxu0 %v204
        %v381 = vpop.f32.mrb[0].mxu0
        %v382 = vadd.f32 0.0, %v381
        %v383 = vpop.f32.mrb[0].mxu0
        %384 = vmatprep.mubr.f32.mxu0 0.0
        %385 = vmatmul.mubr.f32.gmra.mrb[0].mxu0 %v207
        %v386 = vpop.f32.mrb[0].mxu0
        %v387 = vadd.f32 0.0, %v386
        %v388 = vpop.f32.mrb[0].mxu0
        %389 = vmatprep.mubr.f32.mxu0 0.0
        %390 = vmatmul.mubr.f32.gmra.mrb[0].mxu0 %v210
        %v391 = vpop.f32.mrb[0].mxu0
        %v392 = vadd.f32 0.0, %v391
        %v393 = vpop.f32.mrb[0].mxu0
        %394 = vmatprep.mubr.f32.mxu0 0.0
        %395 = vmatmul.mubr.f32.gmra.mrb[0].mxu0 %v213
        %v396 = vpop.f32.mrb[0].mxu0
        %v397 = vadd.f32 0.0, %v396
        %v398 = vpop.f32.mrb[0].mxu0
        %399 = vmatprep.mubr.f32.mxu0 0.0
        %400 = vmatmul.mubr.f32.gmra.mrb[0].mxu0 %v216
        %v401 = vpop.f32.mrb[0].mxu0
        %v402 = vadd.f32 0.0, %v401
        %v403 = vpop.f32.mrb[0].mxu0
        %404 = vmatprep.mubr.f32.mxu0 0.0
        %405 = vmatmul.mubr.f32.gmra.mrb[0].mxu0 %v219
        %v406 = vpop.f32.mrb[0].mxu0
        %v407 = vadd.f32 0.0, %v406
        %v408 = vpop.f32.mrb[0].mxu0
        %409 = vmatprep.mubr.f32.mxu0 0.0
        %410 = vmatmul.mubr.f32.gmra.mrb[0].mxu0 %v222
        %v411 = vpop.f32.mrb[0].mxu0
        %v412 = vadd.f32 0.0, %v411
        %v413 = vpop.f32.mrb[0].mxu0
        %414 = vmatprep.mubr.f32.mxu0 0.0
        %415 = vmatmul.mubr.f32.gmra.mrb[0].mxu0 %v225
        %v416 = vpop.f32.mrb[0].mxu0
        %v417 = vadd.f32 0.0, %v416
        %v418 = vpop.f32.mrb[0].mxu0
        %419 = vmatprep.mubr.f32.mxu0 0.0
        %420 = vmatmul.mubr.f32.gmra.mrb[0].mxu0 %v228
        %v421 = vpop.f32.mrb[0].mxu0
        %v422 = vadd.f32 0.0, %v421
        %v423 = vpop.f32.mrb[0].mxu0
        %424 = vmatprep.mubr.f32.mxu0 0.0
        %425 = vmatmul.mubr.f32.gmra.mrb[0].mxu0 %v231
        %v426 = vpop.f32.mrb[0].mxu0
        %v427 = vadd.f32 0.0, %v426
        %v428 = vpop.f32.mrb[0].mxu0
        %429 = vmatprep.mubr.f32.mxu0 0.0
        %430 = vmatmul.mubr.f32.gmra.mrb[0].mxu0 %v234
        %v431 = vpop.f32.mrb[0].mxu0
        %v432 = vadd.f32 0.0, %v431
        %v433 = vpop.f32.mrb[0].mxu0
        %434 = vmatprep.mubr.f32.mxu0 0.0
        %435 = vmatmul.mubr.f32.gmra.mrb[0].mxu0 %v237
        %v436 = vpop.f32.mrb[0].mxu0
        %v437 = vadd.f32 0.0, %v436
        %v438 = vpop.f32.mrb[0].mxu0
        %439 = vmatprep.mubr.f32.mxu0 0.0
        %440 = vmatmul.mubr.f32.gmra.mrb[0].mxu0 %v240
        %v441 = vpop.f32.mrb[0].mxu0
        %v442 = vadd.f32 0.0, %v441
        %v443 = vpop.f32.mrb[0].mxu0
        %444 = vmatprep.mubr.f32.mxu0 0.0
        %445 = vmatmul.mubr.f32.gmra.mrb[0].mxu0 %v243
        %v446 = vpop.f32.mrb[0].mxu0
        %v447 = vadd.f32 0.0, %v446
        %v448 = vpop.f32.mrb[0].mxu0
        %449 = vmatprep.mubr.f32.mxu0 0.0
        %450 = vmatmul.mubr.f32.gmra.mrb[0].mxu0 %v246
        %v451 = vpop.f32.mrb[0].mxu0
        %v452 = vadd.f32 0.0, %v451
        %v453 = vpop.f32.mrb[0].mxu0
        %454 = vmatprep.mubr.f32.mxu0 0.0
        %455 = vmatmul.mubr.f32.gmra.mrb[0].mxu0 %v249
        %v456 = vpop.f32.mrb[0].mxu0
        %v457 = vadd.f32 0.0, %v456
        %v458 = vpop.f32.mrb[0].mxu0
        %459 = vmatprep.mubr.f32.mxu0 0.0
        %460 = vmatmul.mubr.f32.gmra.mrb[0].mxu0 %v252
        %v461 = vpop.f32.mrb[0].mxu0
        %v462 = vadd.f32 0.0, %v461
        %v463 = vpop.f32.mrb[0].mxu0
        %464 = vmatprep.mubr.f32.mxu0 0.0
        %465 = vmatmul.mubr.f32.gmra.mrb[0].mxu0 %v255
        %v466 = vpop.f32.mrb[0].mxu0
        %v467 = vadd.f32 0.0, %v466
        %v468 = vpop.f32.mrb[0].mxu0
        %469 = vmatprep.mubr.f32.mxu0 0.0
        %470 = vmatmul.mubr.f32.gmra.mrb[0].mxu0 %v258
        %v471 = vpop.f32.mrb[0].mxu0
        %v472 = vadd.f32 0.0, %v471
        %v473 = vpop.f32.mrb[0].mxu0
        %474 = vmatprep.mubr.f32.mxu0 0.0
        %475 = vmatmul.mubr.f32.gmra.mrb[0].mxu0 %v261
        %v476 = vpop.f32.mrb[0].mxu0
        %v477 = vadd.f32 0.0, %v476
        %v478 = vpop.f32.mrb[0].mxu0
        %479 = vmatprep.mubr.f32.mxu0 0.0
        %480 = vmatmul.mubr.f32.gmra.mrb[0].mxu0 %v264
        %v481 = vpop.f32.mrb[0].mxu0
        %v482 = vadd.f32 0.0, %v481
        %v483 = vpop.f32.mrb[0].mxu0
        %484 = vmatprep.mubr.f32.mxu0 0.0
        %485 = vmatmul.mubr.f32.gmra.mrb[0].mxu0 %v267
        %v486 = vpop.f32.mrb[0].mxu0
        %v487 = vadd.f32 0.0, %v486
        %v488 = vpop.f32.mrb[0].mxu0
        %489 = vmatprep.mubr.f32.mxu0 0.0
        %490 = vmatmul.mubr.f32.gmra.mrb[0].mxu0 %v270
        %v491 = vpop.f32.mrb[0].mxu0
        %v492 = vadd.f32 0.0, %v491
        %v493 = vpop.f32.mrb[0].mxu0
        %494 = vmatprep.mubr.f32.mxu0 0.0
        %495 = vmatmul.mubr.f32.gmra.mrb[0].mxu0 %v273
        %v496 = vpop.f32.mrb[0].mxu0
        %v497 = vadd.f32 0.0, %v496
        %v498 = vpop.f32.mrb[0].mxu0
        %499 = vdwg.mxu0
        %v500 = vmul.f32 %v342, 0.33333334
        %v501 = vmul.f32 %v347, 0.33333334
        %v502 = vmul.f32 %v352, 0.33333334
        %v503 = vmul.f32 %v357, 0.33333334
        %v504 = vmul.f32 %v362, 0.33333334
        %v505 = vmul.f32 %v367, 0.33333334
        %v506 = vmul.f32 %v372, 0.33333334
        %v507 = vmul.f32 %v377, 0.33333334
        %v508 = vmul.f32 %v382, 0.33333334
        %v509 = vmul.f32 %v387, 0.33333334
        %v510 = vmul.f32 %v392, 0.33333334
        %v511 = vmul.f32 %v397, 0.33333334
        %v512 = vmul.f32 %v402, 0.33333334
        %v513 = vmul.f32 %v407, 0.33333334
        %v514 = vmul.f32 %v412, 0.33333334
        %v515 = vmul.f32 %v417, 0.33333334
        %v516 = vmul.f32 %v422, 0.33333334
        %v517 = vmul.f32 %v427, 0.33333334
        %v518 = vmul.f32 %v432, 0.33333334
        %v519 = vmul.f32 %v437, 0.33333334
        %v520 = vmul.f32 %v442, 0.33333334
        %v521 = vmul.f32 %v447, 0.33333334
        %v522 = vmul.f32 %v452, 0.33333334
        %v523 = vmul.f32 %v457, 0.33333334
        %v524 = vmul.f32 %v462, 0.33333334
        %v525 = vmul.f32 %v467, 0.33333334
        %v526 = vmul.f32 %v472, 0.33333334
        %v527 = vmul.f32 %v477, 0.33333334
        %v528 = vmul.f32 %v482, 0.33333334
        %v529 = vmul.f32 %v487, 0.33333334
        %v530 = vmul.f32 %v492, 0.33333334
        %v531 = vmul.f32 %v497, 0.33333334
        %v532 = vpack.c.bf16 %v501, %v500
        %v533 = vpack.c.bf16 %v503, %v502
        %v534 = vpack.c.bf16 %v505, %v504
        %v535 = vpack.c.bf16 %v507, %v506
        %v536 = vpack.c.bf16 %v509, %v508
        %v537 = vpack.c.bf16 %v511, %v510
        %v538 = vpack.c.bf16 %v513, %v512
        %v539 = vpack.c.bf16 %v515, %v514
        %v540 = vpack.c.bf16 %v517, %v516
        %v541 = vpack.c.bf16 %v519, %v518
        %v542 = vpack.c.bf16 %v521, %v520
        %v543 = vpack.c.bf16 %v523, %v522
        %v544 = vpack.c.bf16 %v525, %v524
        %v545 = vpack.c.bf16 %v527, %v526
        %v546 = vpack.c.bf16 %v529, %v528
        %v547 = vpack.c.bf16 %v531, %v530
        %v564 = vunpack.c.l.b16 %v532
        %v565 = vunpack.c.h.b16 %v532
        %v566 = vunpack.c.l.b16 %v533
        %v567 = vunpack.c.h.b16 %v533
        %v568 = vunpack.c.l.b16 %v534
        %v569 = vunpack.c.h.b16 %v534
        %v570 = vunpack.c.l.b16 %v535
        %v571 = vunpack.c.h.b16 %v535
        %v572 = vunpack.c.l.b16 %v536
        %v573 = vunpack.c.h.b16 %v536
        %v574 = vunpack.c.l.b16 %v537
        %v575 = vunpack.c.h.b16 %v537
        %v576 = vunpack.c.l.b16 %v538
        %v577 = vunpack.c.h.b16 %v538
        %v578 = vunpack.c.l.b16 %v539
        %v579 = vunpack.c.h.b16 %v539
        %v580 = vunpack.c.l.b16 %v540
        %v581 = vunpack.c.h.b16 %v540
        %v582 = vunpack.c.l.b16 %v541
        %v583 = vunpack.c.h.b16 %v541
        %v584 = vunpack.c.l.b16 %v542
        %v585 = vunpack.c.h.b16 %v542
        %v586 = vunpack.c.l.b16 %v543
        %v587 = vunpack.c.h.b16 %v543
        %v588 = vunpack.c.l.b16 %v544
        %v589 = vunpack.c.h.b16 %v544
        %v590 = vunpack.c.l.b16 %v545
        %v591 = vunpack.c.h.b16 %v545
        %v592 = vunpack.c.l.b16 %v546
        %v593 = vunpack.c.h.b16 %v546
        %v594 = vunpack.c.l.b16 %v547
        %v595 = vunpack.c.h.b16 %v547
        %v596 = vpack.c.b16 %v564, %v564
        %v597 = vpack.c.b16 %v565, %v565
        %v598 = vpack.c.b16 %v566, %v566
        %v599 = vpack.c.b16 %v567, %v567
        %v600 = vpack.c.b16 %v568, %v568
        %v601 = vpack.c.b16 %v569, %v569
        %v602 = vpack.c.b16 %v570, %v570
        %v603 = vpack.c.b16 %v571, %v571
        %v604 = vpack.c.b16 %v572, %v572
        %v605 = vpack.c.b16 %v573, %v573
        %v606 = vpack.c.b16 %v574, %v574
        %v607 = vpack.c.b16 %v575, %v575
        %v608 = vpack.c.b16 %v576, %v576
        %v609 = vpack.c.b16 %v577, %v577
        %v610 = vpack.c.b16 %v578, %v578
        %v611 = vpack.c.b16 %v579, %v579
        %v612 = vpack.c.b16 %v580, %v580
        %v613 = vpack.c.b16 %v581, %v581
        %v614 = vpack.c.b16 %v582, %v582
        %v615 = vpack.c.b16 %v583, %v583
        %v616 = vpack.c.b16 %v584, %v584
        %v617 = vpack.c.b16 %v585, %v585
        %v618 = vpack.c.b16 %v586, %v586
        %v619 = vpack.c.b16 %v587, %v587
        %v620 = vpack.c.b16 %v588, %v588
        %v621 = vpack.c.b16 %v589, %v589
        %v622 = vpack.c.b16 %v590, %v590
        %v623 = vpack.c.b16 %v591, %v591
        %v624 = vpack.c.b16 %v592, %v592
        %v625 = vpack.c.b16 %v593, %v593
        %v626 = vpack.c.b16 %v594, %v594
        %v627 = vpack.c.b16 %v595, %v595
        %660 = vst [vmem:[%s136] sm:$0xf] %v596
        %661 = vst [vmem:[%s136 + $0x4] sm:$0xf] %v597
        %662 = vst [vmem:[%s136 + $0x8] sm:$0xf] %v598
        %663 = vst [vmem:[%s136 + $0xc] sm:$0xf] %v599
        %664 = vst [vmem:[%s136 + $0x10] sm:$0xf] %v600
        %665 = vst [vmem:[%s136 + $0x14] sm:$0xf] %v601
        %666 = vst [vmem:[%s136 + $0x18] sm:$0xf] %v602
        %667 = vst [vmem:[%s136 + $0x1c] sm:$0xf] %v603
        %668 = vst [vmem:[%s136 + $0x20] sm:$0xf] %v604
        %669 = vst [vmem:[%s136 + $0x24] sm:$0xf] %v605
        %670 = vst [vmem:[%s136 + $0x28] sm:$0xf] %v606
        %671 = vst [vmem:[%s136 + $0x2c] sm:$0xf] %v607
        %672 = vst [vmem:[%s136 + $0x30] sm:$0xf] %v608
        %673 = vst [vmem:[%s136 + $0x34] sm:$0xf] %v609
        %674 = vst [vmem:[%s136 + $0x38] sm:$0xf] %v610
        %675 = vst [vmem:[%s136 + $0x3c] sm:$0xf] %v611
        %676 = vst [vmem:[%s136 + $0x40] sm:$0xf] %v612
        %677 = vst [vmem:[%s136 + $0x44] sm:$0xf] %v613
        %678 = vst [vmem:[%s136 + $0x48] sm:$0xf] %v614
        %679 = vst [vmem:[%s136 + $0x4c] sm:$0xf] %v615
        %680 = vst [vmem:[%s136 + $0x50] sm:$0xf] %v616
        %681 = vst [vmem:[%s136 + $0x54] sm:$0xf] %v617
        %682 = vst [vmem:[%s136 + $0x58] sm:$0xf] %v618
        %683 = vst [vmem:[%s136 + $0x5c] sm:$0xf] %v619
        %684 = vst [vmem:[%s136 + $0x60] sm:$0xf] %v620
        %685 = vst [vmem:[%s136 + $0x64] sm:$0xf] %v621
        %686 = vst [vmem:[%s136 + $0x68] sm:$0xf] %v622
        %687 = vst [vmem:[%s136 + $0x6c] sm:$0xf] %v623
        %688 = vst [vmem:[%s136 + $0x70] sm:$0xf] %v624
        %689 = vst [vmem:[%s136 + $0x74] sm:$0xf] %v625
        %690 = vst [vmem:[%s136 + $0x78] sm:$0xf] %v626
        %691 = vst [vmem:[%s136 + $0x7c] sm:$0xf] %v627
        %s692 = sand.u32 %s71, 1
        %s693 = scalar_lea.sflag [#allocation3], %s692
        %s694 = sand.u32 %s71, 1
        %s695 = smul.addr %s694, 128
        %s696 = scalar_lea.vmem [#allocation2], %s695
        // Predicated region
        $region29: #{tpu_custom_call.1} parent=27 // pred_check
          %p697 = pneg %p81
        $region30: #{tpu_custom_call.1} parent=27 // pred_check_branch
          %699 = sbr.rel (%p697) target = $region32
        $region31: #{tpu_custom_call.1} parent=27 // pred_region
          %s701 = ssub.s32 2048, 2048
          %702 = vsyncadd %s693, %s701
          %s703 = smul.addr %s16, 32
          %s704 = smul.addr %s703, 64
          %s705 = scalar_lea.hbm %s2, %s704
          %s706 = sshll.u32 %s696, 4
          %s707 = int_to_ptr.vmem [resolvable:$true] %s706
          %712 = dma.vmem_to_hbm [thread:$0]  %s707, 2048, %s705, %s693, 64, 64, 4
        $region32: #{tpu_custom_call.1} parent=27 // pred_fallthru
          _
      $region28: #{tpu_custom_call.1} parent=5 // pred_fallthru
        _
      %p713 = scmp.le.s32.totalorder 2, %s11
      // Predicated region
      $region33: #{tpu_custom_call.1} parent=5 // pred_check
        %p714 = pneg %p713
      $region34: #{tpu_custom_call.1} parent=5 // pred_check_branch
        %716 = sbr.rel (%p714) target = $region36
      $region35: #{tpu_custom_call.1} parent=5 // pred_region
        %s717 = ssub.s32 %s11, 2
        // Predicated region
        $region37: #{tpu_custom_call.1} parent=35 // pred_check
          %p718 = pneg %p87
        $region38: #{tpu_custom_call.1} parent=35 // pred_check_branch
          %720 = sbr.rel (%p718) target = $region40
        $region39: #{tpu_custom_call.1} parent=35 // pred_region
          %s721 = sand.u32 %s72, 1
          %s722 = scalar_lea.sflag [#allocation3], %s721
          %s723 = sand.u32 %s72, 1
          %s724 = smul.addr %s723, 128
          %s725 = scalar_lea.vmem [#allocation2], %s724
          %726 = dma.done %s722, 2048
        $region40: #{tpu_custom_call.1} parent=35 // pred_fallthru
          _
      $region36: #{tpu_custom_call.1} parent=5 // pred_fallthru
        _
    $region6: #{tpu_custom_call.1} parent=1 // loop_footer
      %s15 = sadd.s32 1, %s11
    $region7: #{tpu_custom_call.1} parent=1 // loop_footer_branch
      %10 = sbr.rel target = $region3
    $region8: #{tpu_custom_call.1} parent=1 // loop_exit
      _
    %727 = vsyncpa [#allocation3], 1
    %s728 = scalar_lea.sflag [#allocation3], 1
    %729 = vsyncpa %s728, 1

</llo_original>
